<compile_context>
chip_gen: v5e
topology: v5e:2x2
jax: 0.10.0
libtpu: 0.0.40
codegen_flags: <defaults>
</compile_context>

<pallas_src>
import math

import jax
import jax.numpy as jnp
from jax.experimental import pallas as pl
from jax.experimental.pallas import tpu as pltpu


def _vmem_capacity_bytes():
    """Physical VMEM per TensorCore; conservative fallback if unknown."""
    try:
        return int(pltpu.get_tpu_info().vmem_capacity_bytes)
    except Exception:
        return 64 << 20  # v7x-sized fallback (safe on all generations)


def _choose_2d_layout(shape):
    """Pick a (rows, lane) factorization that is a free reshape (no pad).

    Prefers a wide multiple-of-128 lane dim (unmasked stores); for odd totals
    falls back to the natural trailing dim as a full-extent lane axis.
    """
    total = math.prod(shape)
    if total % 128 == 0:
        # Any factorization of a contiguous row-major array is a free view.
        # Widest multiple-of-128 lane (<= 4096) that keeps >= 8 rows (or
        # covers the whole array).  cand = 128 always qualifies as a floor.
        for cand in range(4096, 127, -128):
            if total % cand == 0 and (total // cand >= 8 or cand == total):
                return total // cand, cand
    # Odd total (rare): use the natural trailing dim; stores may be masked
    # but no extra HBM traffic is incurred.
    lane = shape[-1] if len(shape) else 1
    return total // lane, lane


def _make_merged_kernel(num_branches):
    def kernel(w_ref, *refs):
        # w_ref : (L,) f32 softmax weights, resident in SMEM (scalar prefetch)
        # refs  : L input tiles of shape (tile_rows, lane) + 1 output tile
        x_refs = refs[:num_branches]
        out_ref = refs[num_branches]
        acc = w_ref[0] * x_refs[0][...].astype(jnp.float32)
        for l in range(1, num_branches):          # L is small & static
            acc = acc + w_ref[l] * x_refs[l][...].astype(jnp.float32)
        out_ref[...] = acc.astype(out_ref.dtype)
    return kernel


def merged_op(alpha, xs):
    """alpha: (L,) architecture params.  xs: list of L same-shape arrays."""
    L = int(alpha.shape[0])
    assert len(xs) == L and L >= 1
    shape = xs[0].shape
    dtype = xs[0].dtype
    itemsize = jnp.dtype(dtype).itemsize
    total = math.prod(shape)
    total_bytes = total * itemsize

    # ---- layout: lane-dense (rows, lane), free reshape, no padding ---------
    rows, lane = _choose_2d_layout(shape)

    # ---- generation-aware tile sizing ---------------------------------------
    vmem_cap = _vmem_capacity_bytes()          # 128 MiB v5e/v6e, 64 MiB v7x
    tile_budget = vmem_cap // 2                # bytes for in-flight tiles

    # In-flight bytes per output row: double-buffered (L inputs + 1 output)
    # tiles plus ~2 f32 upcast/accumulator temps when inputs are sub-32-bit.
    extra_f32 = 0 if itemsize >= 4 else 8
    per_row_bytes = lane * (2 * (L + 1) * itemsize + extra_f32)
    max_tile_rows = max(8, tile_budget // per_row_bytes)

    # Keep >= MIN_GRID steps on multi-MiB arrays so both v7x TensorCores
    # (and the software pipeline) have work; tiny arrays stay single-block.
    MIN_GRID = 8
    if total_bytes > (2 << 20) and rows >= MIN_GRID * 8:
        max_tile_rows = min(max_tile_rows, max(8, (rows // MIN_GRID) // 8 * 8))

    if rows <= max_tile_rows:
        tile_rows = rows                       # full extent: always legal
    else:
        tile_rows = max(8, (max_tile_rows // 8) * 8)   # keep (8,128) alignment
    grid_len = int(pl.cdiv(rows, tile_rows))   # ragged last block handled by Pallas

    tile_bytes = tile_rows * lane * itemsize
    footprint = (2 * (L + 1) * tile_bytes
                 + (2 * tile_rows * lane * 4 if itemsize < 4 else 0))
    vmem_limit = int(min(vmem_cap * 3 // 4,
                         max(footprint + (8 << 20), 32 << 20)))

    xs2d = [x.reshape(rows, lane) for x in xs]   # free views (contiguous)

    # Softmax hoisted out of the kernel: O(L) scalar work done once, in f32.
    w = jax.nn.softmax(alpha.astype(jnp.float32))

    block = (tile_rows, lane)
    idx = lambda i, w_ref: (i, 0)     # scalar-prefetch ref trails grid indices

    # Deeper buffering only when many branches force sub-MiB tiles.
    use_deep_buffering = tile_bytes < (1 << 20) and grid_len >= 4

    def in_spec():
        if use_deep_buffering:
            return pl.BlockSpec(block, idx, pipeline_mode=pl.Buffered(3))
        return pl.BlockSpec(block, idx)

    out2d = pl.pallas_call(
        _make_merged_kernel(L),
        out_shape=jax.ShapeDtypeStruct((rows, lane), dtype),
        grid_spec=pltpu.PrefetchScalarGridSpec(
            num_scalar_prefetch=1,
            grid=(grid_len,),
            in_specs=[in_spec() for _ in range(L)],
            out_specs=pl.BlockSpec(block, idx),
        ),
        compiler_params=pltpu.CompilerParams(
            dimension_semantics=("parallel",),   # megacore-shard on v7x
            vmem_limit_bytes=vmem_limit,         # footprint-derived, per-gen
        ),
        cost_estimate=pl.CostEstimate(
            flops=2 * L * total,
            transcendentals=0,
            bytes_accessed=(L + 1) * total_bytes,
        ),
    )(w, *xs2d)

    return out2d.reshape(shape)


if __name__ == "__main__":
    key = jax.random.PRNGKey(0)

    # ---- Test 1: MergedOp init (alpha = zeros), NCHW branch outputs --------
    L = 3
    alpha = jnp.zeros((L,), dtype=jnp.float32)
    B, C, H, W = 2, 4, 16, 16
    keys = jax.random.split(key, L)
    xs = [jax.random.normal(k, (B, C, H, W), dtype=jnp.float32) for k in keys]

    out = jax.block_until_ready(merged_op(alpha, xs))
    w_ref = jax.nn.softmax(alpha)
    ref = sum(w_ref[l] * xs[l] for l in range(L))
    assert out.shape == (B, C, H, W)
    assert jnp.allclose(out, ref, atol=1e-5, rtol=1e-5)

    # ---- Test 2: non-uniform alpha, odd shape (total not divisible by 128) --
    alpha2 = jax.random.normal(jax.random.PRNGKey(1), (L,), dtype=jnp.float32)
    xs2 = [jax.random.normal(k, (3, 5, 7, 11), dtype=jnp.float32)
           for k in jax.random.split(jax.random.PRNGKey(2), L)]
    out2 = jax.block_until_ready(merged_op(alpha2, xs2))
    w2 = jax.nn.softmax(alpha2)
    ref2 = sum(w2[l] * xs2[l] for l in range(L))
    assert jnp.allclose(out2, ref2, atol=1e-5, rtol=1e-5)

    # ---- Test 3: bf16 inputs (f32 accumulation in-kernel) -------------------
    xs3 = [x.astype(jnp.bfloat16) for x in xs]
    out3 = jax.block_until_ready(merged_op(alpha2, xs3))
    ref3 = sum(w2[l] * xs3[l].astype(jnp.float32)
               for l in range(L)).astype(jnp.bfloat16)
    assert jnp.allclose(out3.astype(jnp.float32), ref3.astype(jnp.float32),
                        atol=2e-2, rtol=2e-2)

    print("KERNEL_OK")
</pallas_src>

<mosaic_0001>
module attributes {stable_mosaic.version = 11 : i64} {
  func.func @kernel(%arg0: i32, %arg1: memref<3xf32, #tpu.memory_space<smem>>, %arg2: memref<1x2048xf32, #tpu.memory_space<vmem>>, %arg3: memref<1x2048xf32, #tpu.memory_space<vmem>>, %arg4: memref<1x2048xf32, #tpu.memory_space<vmem>>, %arg5: memref<1x2048xf32, #tpu.memory_space<vmem>>) attributes {dimension_semantics = [#tpu.dimension_semantics<parallel>], iteration_bounds = array<i64: 1>, scalar_prefetch = 1 : i64, scratch_operands = 0 : i64, tpu.core_type = #tpu.core_type<tc>, window_params = [{transform_indices = @transform_0, window_bounds = array<i64: 1, 2048>}, {transform_indices = @transform_1, window_bounds = array<i64: 1, 2048>}, {transform_indices = @transform_2, window_bounds = array<i64: 1, 2048>}, {transform_indices = @transform_3, window_bounds = array<i64: 1, 2048>}]} {
    %c0 = arith.constant 0 : index
    %0 = memref.load %arg1[%c0] : memref<3xf32, #tpu.memory_space<smem>>
    %c0_0 = arith.constant 0 : index
    %c0_1 = arith.constant 0 : index
    %1 = vector.load %arg2[%c0_0, %c0_1] : memref<1x2048xf32, #tpu.memory_space<vmem>>, vector<1x2048xf32>
    %2 = vector.broadcast %0 : f32 to vector<1x2048xf32>
    %3 = arith.mulf %2, %1 : vector<1x2048xf32>
    %c1 = arith.constant 1 : index
    %4 = memref.load %arg1[%c1] : memref<3xf32, #tpu.memory_space<smem>>
    %c0_2 = arith.constant 0 : index
    %c0_3 = arith.constant 0 : index
    %5 = vector.load %arg3[%c0_2, %c0_3] : memref<1x2048xf32, #tpu.memory_space<vmem>>, vector<1x2048xf32>
    %6 = vector.broadcast %4 : f32 to vector<1x2048xf32>
    %7 = arith.mulf %6, %5 : vector<1x2048xf32>
    %8 = arith.addf %3, %7 : vector<1x2048xf32>
    %c2 = arith.constant 2 : index
    %9 = memref.load %arg1[%c2] : memref<3xf32, #tpu.memory_space<smem>>
    %c0_4 = arith.constant 0 : index
    %c0_5 = arith.constant 0 : index
    %10 = vector.load %arg4[%c0_4, %c0_5] : memref<1x2048xf32, #tpu.memory_space<vmem>>, vector<1x2048xf32>
    %11 = vector.broadcast %9 : f32 to vector<1x2048xf32>
    %12 = arith.mulf %11, %10 : vector<1x2048xf32>
    %13 = arith.addf %8, %12 : vector<1x2048xf32>
    %c0_6 = arith.constant 0 : index
    %c0_7 = arith.constant 0 : index
    %14 = vector.load %arg5[%c0_6, %c0_7] : memref<1x2048xf32, #tpu.memory_space<vmem>>, vector<1x2048xf32>
    tpu.vector_store %arg5[%c0_6, %c0_7], %13 {strides = array<i32>} : memref<1x2048xf32, #tpu.memory_space<vmem>>, vector<1x2048xf32>,
    return
  }
  func.func @transform_0(%arg0: i32, %arg1: memref<3xf32, #tpu.memory_space<smem>>) -> (i32, i32) {
    %c0_i32 = arith.constant 0 : i32
    %c0_i32_0 = arith.constant 0 : i32
    return %arg0, %c0_i32 : i32, i32
  }
  func.func @transform_1(%arg0: i32, %arg1: memref<3xf32, #tpu.memory_space<smem>>) -> (i32, i32) {
    %c0_i32 = arith.constant 0 : i32
    %c0_i32_0 = arith.constant 0 : i32
    return %arg0, %c0_i32 : i32, i32
  }
  func.func @transform_2(%arg0: i32, %arg1: memref<3xf32, #tpu.memory_space<smem>>) -> (i32, i32) {
    %c0_i32 = arith.constant 0 : i32
    %c0_i32_0 = arith.constant 0 : i32
    return %arg0, %c0_i32 : i32, i32
  }
  func.func @transform_3(%arg0: i32, %arg1: memref<3xf32, #tpu.memory_space<smem>>) -> (i32, i32) {
    %c0_i32 = arith.constant 0 : i32
    %c0_i32_0 = arith.constant 0 : i32
    return %arg0, %c0_i32 : i32, i32
  }
}

</mosaic_0001>

<llo_original>
// kernel: tpu_custom_call.1
$region0: #{tpu_custom_call.1}
  #allocation0 [shape = 'u32[]', space=smem, size = 0x4, offset = 0x4, fixed_abs, tag = 'smem constant byte address 0x4 - core index']
  #allocation1 [shape = 'u32[72,128]{1,0:T(1,128)}', space=vmem, size = 0x9000, scoped, tag = 'internal scratch']
  #allocation2 [shape = 's32[1]{0}', space=sflag, size = 0x4, scoped, tag = 'scoped memory for tpu_custom_call.1']
  #allocation3 [shape = 'u8[512]{0}', space=smem, size = 0x200, scoped, tag = 'prefetched SMEM operand 0']
  %s0 = inlined_call_operand.hbm [shape: f32[3], index: 0, kind: input, shape index: {}]
  %s1 = inlined_call_operand.hbm [shape: f32[1,2048], index: 1, kind: input, shape index: {}]
  %s2 = inlined_call_operand.hbm [shape: f32[1,2048], index: 2, kind: input, shape index: {}]
  %s3 = inlined_call_operand.hbm [shape: f32[1,2048], index: 3, kind: input, shape index: {}]
  %s4 = inlined_call_operand.hbm [shape: f32[1,2048], index: 4, kind: output, shape index: {}]
  %s5 = sld [smem:[#allocation0]]
  $region34: #{tpu_custom_call.1} parent=0
    _
  %s7 = ssub.s32 1, %s5
  %s8 = scalar_select 0, %s7, %s5
  %s10 = sshll.u32 %s0, 4
  %s11 = int_to_ptr.hbm [resolvable:$true] %s10
  %13 = dma.hbm_to_smem %s11, 16, [#allocation3], [#allocation2]
  %15 = dma.done [#allocation2], 16
  %16 = sfence
  $region1: #{tpu_custom_call.1} parent=0
    #allocation4 [shape = 'u8[8192]{0}', space=vmem, size = 0x2000, scoped, tag = 'input window, operand 1, single buffered']
    #allocation5 [shape = 's32[1]{0}', space=sflag, size = 0x4, scoped, tag = 'scoped memory for tpu_custom_call.1']
    #allocation6 [shape = 's32[1]{0}', space=sflag, size = 0x4, scoped, tag = 'scoped memory for tpu_custom_call.1']
    #allocation7 [shape = 'u8[8192]{0}', space=vmem, size = 0x2000, scoped, tag = 'input window, operand 2, single buffered']
    #allocation8 [shape = 's32[1]{0}', space=sflag, size = 0x4, scoped, tag = 'scoped memory for tpu_custom_call.1']
    #allocation9 [shape = 'u8[8192]{0}', space=vmem, size = 0x2000, scoped, tag = 'input window, operand 3, single buffered']
    #allocation10 [shape = 'u8[8192]{0}', space=vmem, size = 0x2000, scoped, tag = 'output window, operand 0, single buffered']
    %17 = vsyncpa [#allocation5], 0
    %18 = vsyncpa [#allocation8], 0
    %19 = vsyncpa [#allocation6], 0
    // Predicated region
    $region2: #{tpu_custom_call.1} parent=1 // pred_check
      _
    $region3: #{tpu_custom_call.1} parent=1 // pred_check_branch
      %21 = sbr.rel (0) target = $region5
    $region4: #{tpu_custom_call.1} parent=1 // pred_region
      %23 = vsyncadd [#allocation5], 0
      %s25 = sshll.u32 %s1, 4
      %s26 = int_to_ptr.hbm [resolvable:$true] %s25
      %s27 = sshll.u32 [#allocation4], 4
      %s28 = int_to_ptr.vmem [resolvable:$true] %s27
      %30 = dma.hbm_to_vmem [thread:$0]  %s26, 256, %s28, [#allocation5]
    $region5: #{tpu_custom_call.1} parent=1 // pred_fallthru
      _
    // Predicated region
    $region6: #{tpu_custom_call.1} parent=1 // pred_check
      _
    $region7: #{tpu_custom_call.1} parent=1 // pred_check_branch
      %32 = sbr.rel (0) target = $region9
    $region8: #{tpu_custom_call.1} parent=1 // pred_region
      %34 = vsyncadd [#allocation8], 0
      %s36 = sshll.u32 %s2, 4
      %s37 = int_to_ptr.hbm [resolvable:$true] %s36
      %s38 = sshll.u32 [#allocation7], 4
      %s39 = int_to_ptr.vmem [resolvable:$true] %s38
      %41 = dma.hbm_to_vmem [thread:$0]  %s37, 256, %s39, [#allocation8]
    $region9: #{tpu_custom_call.1} parent=1 // pred_fallthru
      _
    // Predicated region
    $region10: #{tpu_custom_call.1} parent=1 // pred_check
      _
    $region11: #{tpu_custom_call.1} parent=1 // pred_check_branch
      %43 = sbr.rel (0) target = $region13
    $region12: #{tpu_custom_call.1} parent=1 // pred_region
      %45 = vsyncadd [#allocation8], 0
      %s47 = sshll.u32 %s3, 4
      %s48 = int_to_ptr.hbm [resolvable:$true] %s47
      %s49 = sshll.u32 [#allocation9], 4
      %s50 = int_to_ptr.vmem [resolvable:$true] %s49
      %52 = dma.hbm_to_vmem [thread:$0]  %s48, 256, %s50, [#allocation8]
    $region13: #{tpu_custom_call.1} parent=1 // pred_fallthru
      _
    // Predicated region
    $region14: #{tpu_custom_call.1} parent=1 // pred_check
      _
    $region15: #{tpu_custom_call.1} parent=1 // pred_check_branch
      %54 = sbr.rel (0) target = $region17
    $region16: #{tpu_custom_call.1} parent=1 // pred_region
      %56 = dma.done [#allocation5], 256
    $region17: #{tpu_custom_call.1} parent=1 // pred_fallthru
      _
    // Predicated region
    $region18: #{tpu_custom_call.1} parent=1 // pred_check
      _
    $region19: #{tpu_custom_call.1} parent=1 // pred_check_branch
      %58 = sbr.rel (0) target = $region21
    $region20: #{tpu_custom_call.1} parent=1 // pred_region
      %60 = dma.done [#allocation8], 256
    $region21: #{tpu_custom_call.1} parent=1 // pred_fallthru
      _
    // Predicated region
    $region22: #{tpu_custom_call.1} parent=1 // pred_check
      _
    $region23: #{tpu_custom_call.1} parent=1 // pred_check_branch
      %62 = sbr.rel (0) target = $region25
    $region24: #{tpu_custom_call.1} parent=1 // pred_region
      %64 = dma.done [#allocation8], 256
    $region25: #{tpu_custom_call.1} parent=1 // pred_fallthru
      _
    %s65 = sld [smem:[#allocation3]]
    %v66 = vld [vmem:[#allocation4] sm:$0xff]
    %v67 = vld [vmem:[#allocation4 + $0x8] sm:$0xff]
    %v68 = vstv %s65
    %v69 = vmul.f32 %v68, %v66
    %v70 = vmul.f32 %v68, %v67
    %s71 = sld [smem:[#allocation3 + $0x1]]
    %v72 = vld [vmem:[#allocation7] sm:$0xff]
    %v73 = vld [vmem:[#allocation7 + $0x8] sm:$0xff]
    %v74 = vstv %s71
    %v75 = vmul.f32 %v74, %v72
    %v76 = vmul.f32 %v74, %v73
    %v77 = vadd.f32 %v69, %v75
    %v78 = vadd.f32 %v70, %v76
    %s79 = sld [smem:[#allocation3 + $0x2]]
    %v80 = vld [vmem:[#allocation9] sm:$0xff]
    %v81 = vld [vmem:[#allocation9 + $0x8] sm:$0xff]
    %v82 = vstv %s79
    %v83 = vmul.f32 %v82, %v80
    %v84 = vmul.f32 %v82, %v81
    %v85 = vadd.f32 %v77, %v83
    %v86 = vadd.f32 %v78, %v84
    %87 = vst [vmem:[#allocation10] sm:$0xff] %v85
    %88 = vst [vmem:[#allocation10 + $0x8] sm:$0xff] %v86
    // Predicated region
    $region26: #{tpu_custom_call.1} parent=1 // pred_check
      _
    $region27: #{tpu_custom_call.1} parent=1 // pred_check_branch
      %90 = sbr.rel (0) target = $region29
    $region28: #{tpu_custom_call.1} parent=1 // pred_region
      %92 = vsyncadd [#allocation6], 0
      %s94 = sshll.u32 [#allocation10], 4
      %s95 = int_to_ptr.vmem [resolvable:$true] %s94
      %s96 = sshll.u32 %s4, 4
      %s97 = int_to_ptr.hbm [resolvable:$true] %s96
      %99 = dma.vmem_to_hbm [thread:$0]  %s95, 256, %s97, [#allocation6]
    $region29: #{tpu_custom_call.1} parent=1 // pred_fallthru
      _
    // Predicated region
    $region30: #{tpu_custom_call.1} parent=1 // pred_check
      _
    $region31: #{tpu_custom_call.1} parent=1 // pred_check_branch
      %101 = sbr.rel (0) target = $region33
    $region32: #{tpu_custom_call.1} parent=1 // pred_region
      %103 = dma.done [#allocation6], 256
    $region33: #{tpu_custom_call.1} parent=1 // pred_fallthru
      _
    %104 = vsyncpa [#allocation5], 1
    %105 = vsyncpa [#allocation8], 1
    %106 = vsyncpa [#allocation6], 1

</llo_original>
